<compile_context>
chip_gen: v6e
topology: v6e:2x2x1
jax: 0.10.0
libtpu: 0.0.40
codegen_flags: <defaults>
</compile_context>

<pallas_src>
import jax
import jax.numpy as jnp
from jax.experimental import pallas as pl
from jax.experimental.pallas import tpu as pltpu


def _leaky_relu(x, slope=0.01):
    # max(x, slope*x) == LeakyReLU for 0 < slope < 1
    return jnp.maximum(x, slope * x)


def _round_up(x, m):
    return (x + m - 1) // m * m


def physics_interact_kernel(v1_ref, v2_ref, w1a_ref, w1b_ref, b1_ref,
                            w2_ref, b2_ref, w3_ref, b3_ref, o_ref):
    cdt = w1a_ref.dtype                       # compute dtype for the MXU (bf16 or f32)

    v1 = v1_ref[...].astype(cdt)              # [TB, d1]
    v2 = v2_ref[...].astype(cdt)              # [TB, d2]

    # Layer 1: split-weight form of cat([v1, v2], 1) @ W1.T   (f32 accumulate)
    h1 = jnp.dot(v1, w1a_ref[...], preferred_element_type=jnp.float32)
    h1 = h1 + jnp.dot(v2, w1b_ref[...], preferred_element_type=jnp.float32)
    h1 = _leaky_relu(h1 + b1_ref[...])        # f32 elementwise

    # Layer 2
    h2 = jnp.dot(h1.astype(cdt), w2_ref[...], preferred_element_type=jnp.float32)
    h2 = _leaky_relu(h2 + b2_ref[...])        # f32 elementwise

    # Layer 3 (no activation)
    out = jnp.dot(h2.astype(cdt), w3_ref[...], preferred_element_type=jnp.float32)
    o_ref[...] = (out + b3_ref[...]).astype(o_ref.dtype)


def prepare_params(params, compute_dtype=jnp.bfloat16):
    """One-time parameter preparation (transpose / split / cast).

    `params` holds PyTorch-layout Linear weights: Wx [out, in], bx [out].
    The concat input of the first layer is [obj_vec_1, obj_vec_2], so W1 is
    split at hidden//2 into the block multiplying each half.
    """
    hidden = params["W1"].shape[1]
    obj_dim = params["W3"].shape[0]
    half = hidden // 2                         # width of each object vector

    w1t = params["W1"].T.astype(compute_dtype)            # [hidden(in), hidden(out)]
    return {
        "w1a": w1t[:half],                                 # [half, hidden]
        "w1b": w1t[half:],                                 # [half, hidden]
        "b1": params["b1"].reshape(1, hidden).astype(jnp.float32),
        "w2": params["W2"].T.astype(compute_dtype),        # [hidden, hidden]
        "b2": params["b2"].reshape(1, hidden).astype(jnp.float32),
        "w3": params["W3"].T.astype(compute_dtype),        # [hidden, obj_dim]
        "b3": params["b3"].reshape(1, obj_dim).astype(jnp.float32),
    }


def physics_interact(obj_vec_1, obj_vec_2, prep, *, tile_b=256):
    """Run the pairwise-potential MLP. `prep` comes from prepare_params()."""
    B, d1 = obj_vec_1.shape
    _, d2 = obj_vec_2.shape
    assert d1 == prep["w1a"].shape[0] and d2 == prep["w1b"].shape[0]
    hidden = prep["w2"].shape[0]
    obj_dim = prep["w3"].shape[1]

    # Batch tile: multiple of 8 (sublanes); small batches get a single tiny tile.
    tb = _round_up(min(tile_b, _round_up(max(B, 1), 8)), 8)
    b_pad = _round_up(B, tb)
    if b_pad != B:
        pad = ((0, b_pad - B), (0, 0))
        obj_vec_1 = jnp.pad(obj_vec_1, pad)
        obj_vec_2 = jnp.pad(obj_vec_2, pad)
    grid = (b_pad // tb,)

    # Advisory cost estimate (layer1 contracts over hidden = d1 + d2).
    flops = 2 * b_pad * (hidden * hidden + hidden * hidden + hidden * obj_dim)
    weight_bytes = sum(int(prep[k].size) * prep[k].dtype.itemsize
                       for k in ("w1a", "w1b", "b1", "w2", "b2", "w3", "b3"))
    bytes_accessed = (obj_vec_1.size * obj_vec_1.dtype.itemsize
                      + obj_vec_2.size * obj_vec_2.dtype.itemsize
                      + weight_bytes
                      + b_pad * obj_dim * 4)
    ce = pl.CostEstimate(flops=flops, transcendentals=0,
                         bytes_accessed=int(bytes_accessed))

    const = lambda a: pl.BlockSpec(a.shape, lambda i: (0, 0))   # resident operand
    out_pad = pl.pallas_call(
        physics_interact_kernel,
        out_shape=jax.ShapeDtypeStruct((b_pad, obj_dim), jnp.float32),
        grid=grid,
        in_specs=[
            pl.BlockSpec((tb, d1), lambda i: (i, 0)),           # obj_vec_1 tile
            pl.BlockSpec((tb, d2), lambda i: (i, 0)),           # obj_vec_2 tile
            const(prep["w1a"]), const(prep["w1b"]), const(prep["b1"]),
            const(prep["w2"]), const(prep["b2"]),
            const(prep["w3"]), const(prep["b3"]),
        ],
        out_specs=pl.BlockSpec((tb, obj_dim), lambda i: (i, 0)),
        compiler_params=pltpu.CompilerParams(
            dimension_semantics=("parallel",)),
        cost_estimate=ce,
    )(obj_vec_1, obj_vec_2,
      prep["w1a"], prep["w1b"], prep["b1"],
      prep["w2"], prep["b2"], prep["w3"], prep["b3"])

    return out_pad[:B] if b_pad != B else out_pad


def init_params(key, hidden, obj_dim):
    """Deterministic synthetic init (Linear layers: weight [out, in], bias [out])."""
    ks = jax.random.split(key, 6)
    scale = 0.1
    return {
        "W1": scale * jax.random.normal(ks[0], (hidden, hidden), jnp.float32),
        "b1": scale * jax.random.normal(ks[1], (hidden,), jnp.float32),
        "W2": scale * jax.random.normal(ks[2], (hidden, hidden), jnp.float32),
        "b2": scale * jax.random.normal(ks[3], (hidden,), jnp.float32),
        "W3": scale * jax.random.normal(ks[4], (obj_dim, hidden), jnp.float32),
        "b3": scale * jax.random.normal(ks[5], (obj_dim,), jnp.float32),
    }


def _reference(obj_vec_1, obj_vec_2, params):
    x = jnp.concatenate([obj_vec_1, obj_vec_2], axis=1)
    h1 = _leaky_relu(x @ params["W1"].T + params["b1"])
    h2 = _leaky_relu(h1 @ params["W2"].T + params["b2"])
    return h2 @ params["W3"].T + params["b3"]


if __name__ == "__main__":
    obj_dim = 16          # each object vector is obj_dim wide
    hidden = 2 * obj_dim  # concat of the two object vectors -> MLP hidden size

    key = jax.random.PRNGKey(0)
    k_p, k_a, k_b, k_c, k_d = jax.random.split(key, 5)
    params = init_params(k_p, hidden, obj_dim)

    # Small shapes from the module spec.
    obj_vec_1 = jax.random.normal(k_a, (2, obj_dim), jnp.float32)
    obj_vec_2 = jax.random.normal(k_b, (2, obj_dim), jnp.float32)
    ref = _reference(obj_vec_1, obj_vec_2, params)

    # f32 compute path: tight check of the split-W1 / grid logic.
    prep_f32 = prepare_params(params, compute_dtype=jnp.float32)
    out_f32 = jax.block_until_ready(physics_interact(obj_vec_1, obj_vec_2, prep_f32))
    assert out_f32.shape == (2, obj_dim)
    assert jnp.allclose(out_f32, ref, atol=1e-5, rtol=1e-5)

    # bf16 MXU path (f32 accumulate + f32 elementwise): loose tolerance.
    prep_bf16 = prepare_params(params, compute_dtype=jnp.bfloat16)
    out_bf16 = jax.block_until_ready(physics_interact(obj_vec_1, obj_vec_2, prep_bf16))
    assert jnp.allclose(out_bf16, ref, atol=5e-2, rtol=5e-2)

    # Larger batch exercising the batch grid + padding path (non-divisible B).
    big1 = jax.random.normal(k_c, (300, obj_dim), jnp.float32)
    big2 = jax.random.normal(k_d, (300, obj_dim), jnp.float32)
    out_big = jax.block_until_ready(physics_interact(big1, big2, prep_bf16, tile_b=128))
    ref_big = _reference(big1, big2, params)
    assert out_big.shape == (300, obj_dim)
    assert jnp.allclose(out_big, ref_big, atol=5e-2, rtol=5e-2)

    print("KERNEL_OK")
</pallas_src>

<mosaic_0001>
module attributes {stable_mosaic.version = 11 : i64} {
  func.func @physics_interact_kernel(%arg0: i32, %arg1: memref<8x16xf32, #tpu.memory_space<vmem>>, %arg2: memref<8x16xf32, #tpu.memory_space<vmem>>, %arg3: memref<16x32xf32, #tpu.memory_space<vmem>>, %arg4: memref<16x32xf32, #tpu.memory_space<vmem>>, %arg5: memref<1x32xf32, #tpu.memory_space<vmem>>, %arg6: memref<32x32xf32, #tpu.memory_space<vmem>>, %arg7: memref<1x32xf32, #tpu.memory_space<vmem>>, %arg8: memref<32x16xf32, #tpu.memory_space<vmem>>, %arg9: memref<1x16xf32, #tpu.memory_space<vmem>>, %arg10: memref<8x16xf32, #tpu.memory_space<vmem>>) attributes {dimension_semantics = [#tpu.dimension_semantics<parallel>], iteration_bounds = array<i64: 1>, scalar_prefetch = 0 : i64, scratch_operands = 0 : i64, tpu.core_type = #tpu.core_type<tc>, window_params = [{transform_indices = @transform_0, window_bounds = array<i64: 8, 16>}, {transform_indices = @transform_1, window_bounds = array<i64: 8, 16>}, {pipeline_mode = #tpu.pipeline_mode<synchronous>, transform_indices = @transform_2, window_bounds = array<i64: 16, 32>}, {pipeline_mode = #tpu.pipeline_mode<synchronous>, transform_indices = @transform_3, window_bounds = array<i64: 16, 32>}, {pipeline_mode = #tpu.pipeline_mode<synchronous>, transform_indices = @transform_4, window_bounds = array<i64: 1, 32>}, {pipeline_mode = #tpu.pipeline_mode<synchronous>, transform_indices = @transform_5, window_bounds = array<i64: 32, 32>}, {pipeline_mode = #tpu.pipeline_mode<synchronous>, transform_indices = @transform_6, window_bounds = array<i64: 1, 32>}, {pipeline_mode = #tpu.pipeline_mode<synchronous>, transform_indices = @transform_7, window_bounds = array<i64: 32, 16>}, {pipeline_mode = #tpu.pipeline_mode<synchronous>, transform_indices = @transform_8, window_bounds = array<i64: 1, 16>}, {transform_indices = @transform_9, window_bounds = array<i64: 8, 16>}]} {
    %c0 = arith.constant 0 : index
    %c0_0 = arith.constant 0 : index
    %0 = vector.load %arg1[%c0, %c0_0] : memref<8x16xf32, #tpu.memory_space<vmem>>, vector<8x16xf32>
    %c0_1 = arith.constant 0 : index
    %c0_2 = arith.constant 0 : index
    %1 = vector.load %arg2[%c0_1, %c0_2] : memref<8x16xf32, #tpu.memory_space<vmem>>, vector<8x16xf32>
    %c0_3 = arith.constant 0 : index
    %c0_4 = arith.constant 0 : index
    %2 = vector.load %arg3[%c0_3, %c0_4] : memref<16x32xf32, #tpu.memory_space<vmem>>, vector<16x32xf32>
    %cst = arith.constant dense<0.000000e+00> : vector<8x32xf32>
    %3 = tpu.matmul %0, %2, %cst {dimension_numbers = #tpu.dot_dimension_numbers<[1], [0], [0], [1], [0, 0, 1, 1], [], []>} : vector<8x16xf32>, vector<16x32xf32>, vector<8x32xf32> -> vector<8x32xf32>
    %c0_5 = arith.constant 0 : index
    %c0_6 = arith.constant 0 : index
    %4 = vector.load %arg4[%c0_5, %c0_6] : memref<16x32xf32, #tpu.memory_space<vmem>>, vector<16x32xf32>
    %cst_7 = arith.constant dense<0.000000e+00> : vector<8x32xf32>
    %5 = tpu.matmul %1, %4, %cst_7 {dimension_numbers = #tpu.dot_dimension_numbers<[1], [0], [0], [1], [0, 0, 1, 1], [], []>} : vector<8x16xf32>, vector<16x32xf32>, vector<8x32xf32> -> vector<8x32xf32>
    %6 = arith.addf %3, %5 : vector<8x32xf32>
    %c0_8 = arith.constant 0 : index
    %c0_9 = arith.constant 0 : index
    %7 = vector.load %arg5[%c0_8, %c0_9] : memref<1x32xf32, #tpu.memory_space<vmem>>, vector<1x32xf32>
    %8 = vector.broadcast %7 : vector<1x32xf32> to vector<8x32xf32>
    %9 = arith.addf %6, %8 : vector<8x32xf32>
    %cst_10 = arith.constant 0.00999999977 : f32
    %10 = vector.broadcast %cst_10 : f32 to vector<8x32xf32>
    %11 = arith.mulf %10, %9 : vector<8x32xf32>
    %12 = arith.maximumf %9, %11 : vector<8x32xf32>
    %c0_11 = arith.constant 0 : index
    %c0_12 = arith.constant 0 : index
    %13 = vector.load %arg6[%c0_11, %c0_12] : memref<32x32xf32, #tpu.memory_space<vmem>>, vector<32x32xf32>
    %cst_13 = arith.constant dense<0.000000e+00> : vector<8x32xf32>
    %14 = tpu.matmul %12, %13, %cst_13 {dimension_numbers = #tpu.dot_dimension_numbers<[1], [0], [0], [1], [0, 0, 1, 1], [], []>} : vector<8x32xf32>, vector<32x32xf32>, vector<8x32xf32> -> vector<8x32xf32>
    %c0_14 = arith.constant 0 : index
    %c0_15 = arith.constant 0 : index
    %15 = vector.load %arg7[%c0_14, %c0_15] : memref<1x32xf32, #tpu.memory_space<vmem>>, vector<1x32xf32>
    %16 = vector.broadcast %15 : vector<1x32xf32> to vector<8x32xf32>
    %17 = arith.addf %14, %16 : vector<8x32xf32>
    %cst_16 = arith.constant 0.00999999977 : f32
    %18 = vector.broadcast %cst_16 : f32 to vector<8x32xf32>
    %19 = arith.mulf %18, %17 : vector<8x32xf32>
    %20 = arith.maximumf %17, %19 : vector<8x32xf32>
    %c0_17 = arith.constant 0 : index
    %c0_18 = arith.constant 0 : index
    %21 = vector.load %arg8[%c0_17, %c0_18] : memref<32x16xf32, #tpu.memory_space<vmem>>, vector<32x16xf32>
    %cst_19 = arith.constant dense<0.000000e+00> : vector<8x16xf32>
    %22 = tpu.matmul %20, %21, %cst_19 {dimension_numbers = #tpu.dot_dimension_numbers<[1], [0], [0], [1], [0, 0, 1, 1], [], []>} : vector<8x32xf32>, vector<32x16xf32>, vector<8x16xf32> -> vector<8x16xf32>
    %c0_20 = arith.constant 0 : index
    %c0_21 = arith.constant 0 : index
    %23 = vector.load %arg9[%c0_20, %c0_21] : memref<1x16xf32, #tpu.memory_space<vmem>>, vector<1x16xf32>
    %24 = vector.broadcast %23 : vector<1x16xf32> to vector<8x16xf32>
    %25 = arith.addf %22, %24 : vector<8x16xf32>
    %c0_22 = arith.constant 0 : index
    %c0_23 = arith.constant 0 : index
    %26 = vector.load %arg10[%c0_22, %c0_23] : memref<8x16xf32, #tpu.memory_space<vmem>>, vector<8x16xf32>
    tpu.vector_store %arg10[%c0_22, %c0_23], %25 {strides = array<i32>} : memref<8x16xf32, #tpu.memory_space<vmem>>, vector<8x16xf32>,
    return
  }
  func.func @transform_0(%arg0: i32) -> (i32, i32) {
    %c0_i32 = arith.constant 0 : i32
    %c0_i32_0 = arith.constant 0 : i32
    return %arg0, %c0_i32 : i32, i32
  }
  func.func @transform_1(%arg0: i32) -> (i32, i32) {
    %c0_i32 = arith.constant 0 : i32
    %c0_i32_0 = arith.constant 0 : i32
    return %arg0, %c0_i32 : i32, i32
  }
  func.func @transform_2(%arg0: i32) -> (i32, i32) {
    %c0_i32 = arith.constant 0 : i32
    %c0_i32_0 = arith.constant 0 : i32
    %c0_i32_1 = arith.constant 0 : i32
    return %c0_i32, %c0_i32_0 : i32, i32
  }
  func.func @transform_3(%arg0: i32) -> (i32, i32) {
    %c0_i32 = arith.constant 0 : i32
    %c0_i32_0 = arith.constant 0 : i32
    %c0_i32_1 = arith.constant 0 : i32
    return %c0_i32, %c0_i32_0 : i32, i32
  }
  func.func @transform_4(%arg0: i32) -> (i32, i32) {
    %c0_i32 = arith.constant 0 : i32
    %c0_i32_0 = arith.constant 0 : i32
    %c0_i32_1 = arith.constant 0 : i32
    return %c0_i32, %c0_i32_0 : i32, i32
  }
  func.func @transform_5(%arg0: i32) -> (i32, i32) {
    %c0_i32 = arith.constant 0 : i32
    %c0_i32_0 = arith.constant 0 : i32
    %c0_i32_1 = arith.constant 0 : i32
    return %c0_i32, %c0_i32_0 : i32, i32
  }
  func.func @transform_6(%arg0: i32) -> (i32, i32) {
    %c0_i32 = arith.constant 0 : i32
    %c0_i32_0 = arith.constant 0 : i32
    %c0_i32_1 = arith.constant 0 : i32
    return %c0_i32, %c0_i32_0 : i32, i32
  }
  func.func @transform_7(%arg0: i32) -> (i32, i32) {
    %c0_i32 = arith.constant 0 : i32
    %c0_i32_0 = arith.constant 0 : i32
    %c0_i32_1 = arith.constant 0 : i32
    return %c0_i32, %c0_i32_0 : i32, i32
  }
  func.func @transform_8(%arg0: i32) -> (i32, i32) {
    %c0_i32 = arith.constant 0 : i32
    %c0_i32_0 = arith.constant 0 : i32
    %c0_i32_1 = arith.constant 0 : i32
    return %c0_i32, %c0_i32_0 : i32, i32
  }
  func.func @transform_9(%arg0: i32) -> (i32, i32) {
    %c0_i32 = arith.constant 0 : i32
    %c0_i32_0 = arith.constant 0 : i32
    return %arg0, %c0_i32 : i32, i32
  }
}

</mosaic_0001>

<llo_original>
// kernel: tpu_custom_call.1
$region0: #{tpu_custom_call.1}
  #allocation0 [shape = 'u32[]', space=smem, size = 0x4, offset = 0x4, fixed_abs, tag = 'smem constant byte address 0x4 - core index']
  #allocation1 [shape = 'u32[144,128]{1,0:T(1,128)}', space=vmem, size = 0x12000, scoped, tag = 'internal scratch']
  %s0 = inlined_call_operand.vmem [shape: f32[8,16], index: 0, kind: input, shape index: {}]
  %s1 = inlined_call_operand.hbm [shape: f32[8,16], index: 1, kind: input, shape index: {}]
  %s2 = inlined_call_operand.vmem [shape: f32[16,32], index: 2, kind: input, shape index: {}]
  %s3 = inlined_call_operand.hbm [shape: f32[16,32], index: 3, kind: input, shape index: {}]
  %s4 = inlined_call_operand.vmem [shape: f32[1,32], index: 4, kind: input, shape index: {}]
  %s5 = inlined_call_operand.vmem [shape: f32[32,32], index: 5, kind: input, shape index: {}]
  %s6 = inlined_call_operand.vmem [shape: f32[1,32], index: 6, kind: input, shape index: {}]
  %s7 = inlined_call_operand.vmem [shape: f32[32,16], index: 7, kind: input, shape index: {}]
  %s8 = inlined_call_operand.vmem [shape: f32[1,16], index: 8, kind: input, shape index: {}]
  %s9 = inlined_call_operand.hbm [shape: f32[8,16], index: 9, kind: output, shape index: {}]
  %s10 = sld [smem:[#allocation0]]
  $region54: #{tpu_custom_call.1} parent=0
    _
  %s12 = ssub.s32 1, %s10
  %s13 = scalar_select 0, %s12, %s10
  $region1: #{tpu_custom_call.1} parent=0
    #allocation2 [shape = 'u8[4096]{0}', space=vmem, size = 0x1000, scoped, tag = 'input window, operand 1, single buffered']
    #allocation3 [shape = 's32[1]{0}', space=sflag, size = 0x4, scoped, tag = 'scoped memory for tpu_custom_call.1']
    #allocation4 [shape = 's32[1]{0}', space=sflag, size = 0x4, scoped, tag = 'scoped memory for tpu_custom_call.1']
    #allocation5 [shape = 'u8[8192]{0}', space=vmem, size = 0x2000, scoped, tag = 'input window, operand 3, single buffered']
    #allocation6 [shape = 's32[1]{0}', space=sflag, size = 0x4, scoped, tag = 'scoped memory for tpu_custom_call.1']
    #allocation7 [shape = 'u8[4096]{0}', space=vmem, size = 0x1000, scoped, tag = 'output window, operand 0, single buffered']
    %14 = vsyncpa [#allocation3], 0
    %15 = vsyncpa [#allocation6], 0
    %16 = vsyncpa [#allocation4], 0
    // Predicated region
    $region2: #{tpu_custom_call.1} parent=1 // pred_check
      _
    $region3: #{tpu_custom_call.1} parent=1 // pred_check_branch
      %18 = sbr.rel (0) target = $region5
    $region4: #{tpu_custom_call.1} parent=1 // pred_region
      _
    $region5: #{tpu_custom_call.1} parent=1 // pred_fallthru
      _
    // Predicated region
    $region6: #{tpu_custom_call.1} parent=1 // pred_check
      _
    $region7: #{tpu_custom_call.1} parent=1 // pred_check_branch
      %20 = sbr.rel (0) target = $region9
    $region8: #{tpu_custom_call.1} parent=1 // pred_region
      %s22 = ssub.s32 128, 128
      %23 = vsyncadd [#allocation3], %s22
      %s25 = sshll.u32 [#allocation2], 4
      %s26 = int_to_ptr.vmem [resolvable:$true] %s25
      %28 = dma.hbm_to_vmem [thread:$0]  %s1, 128, %s26, [#allocation3]
    $region9: #{tpu_custom_call.1} parent=1 // pred_fallthru
      _
    // Predicated region
    $region10: #{tpu_custom_call.1} parent=1 // pred_check
      _
    $region11: #{tpu_custom_call.1} parent=1 // pred_check_branch
      %30 = sbr.rel (0) target = $region13
    $region12: #{tpu_custom_call.1} parent=1 // pred_region
      _
    $region13: #{tpu_custom_call.1} parent=1 // pred_fallthru
      _
    // Predicated region
    $region14: #{tpu_custom_call.1} parent=1 // pred_check
      _
    $region15: #{tpu_custom_call.1} parent=1 // pred_check_branch
      %32 = sbr.rel (0) target = $region17
    $region16: #{tpu_custom_call.1} parent=1 // pred_region
      %s34 = ssub.s32 256, 256
      %35 = vsyncadd [#allocation6], %s34
      %s36 = sshll.u32 [#allocation5], 4
      %s37 = int_to_ptr.vmem [resolvable:$true] %s36
      %42 = dma.hbm_to_vmem [thread:$0]  %s3, 256, %s37, [#allocation6], 128, 128, 8
    $region17: #{tpu_custom_call.1} parent=1 // pred_fallthru
      _
    // Predicated region
    $region18: #{tpu_custom_call.1} parent=1 // pred_check
      _
    $region19: #{tpu_custom_call.1} parent=1 // pred_check_branch
      %44 = sbr.rel (0) target = $region21
    $region20: #{tpu_custom_call.1} parent=1 // pred_region
      _
    $region21: #{tpu_custom_call.1} parent=1 // pred_fallthru
      _
    // Predicated region
    $region22: #{tpu_custom_call.1} parent=1 // pred_check
      _
    $region23: #{tpu_custom_call.1} parent=1 // pred_check_branch
      %46 = sbr.rel (0) target = $region25
    $region24: #{tpu_custom_call.1} parent=1 // pred_region
      _
    $region25: #{tpu_custom_call.1} parent=1 // pred_fallthru
      _
    // Predicated region
    $region26: #{tpu_custom_call.1} parent=1 // pred_check
      _
    $region27: #{tpu_custom_call.1} parent=1 // pred_check_branch
      %48 = sbr.rel (0) target = $region29
    $region28: #{tpu_custom_call.1} parent=1 // pred_region
      _
    $region29: #{tpu_custom_call.1} parent=1 // pred_fallthru
      _
    // Predicated region
    $region30: #{tpu_custom_call.1} parent=1 // pred_check
      _
    $region31: #{tpu_custom_call.1} parent=1 // pred_check_branch
      %50 = sbr.rel (0) target = $region33
    $region32: #{tpu_custom_call.1} parent=1 // pred_region
      _
    $region33: #{tpu_custom_call.1} parent=1 // pred_fallthru
      _
    // Predicated region
    $region34: #{tpu_custom_call.1} parent=1 // pred_check
      _
    $region35: #{tpu_custom_call.1} parent=1 // pred_check_branch
      %52 = sbr.rel (0) target = $region37
    $region36: #{tpu_custom_call.1} parent=1 // pred_region
      _
    $region37: #{tpu_custom_call.1} parent=1 // pred_fallthru
      _
    // Predicated region
    $region38: #{tpu_custom_call.1} parent=1 // pred_check
      _
    $region39: #{tpu_custom_call.1} parent=1 // pred_check_branch
      %54 = sbr.rel (0) target = $region41
    $region40: #{tpu_custom_call.1} parent=1 // pred_region
      %55 = dma.done [#allocation3], 128
    $region41: #{tpu_custom_call.1} parent=1 // pred_fallthru
      _
    // Predicated region
    $region42: #{tpu_custom_call.1} parent=1 // pred_check
      _
    $region43: #{tpu_custom_call.1} parent=1 // pred_check_branch
      %57 = sbr.rel (0) target = $region45
    $region44: #{tpu_custom_call.1} parent=1 // pred_region
      %58 = dma.done [#allocation6], 256
    $region45: #{tpu_custom_call.1} parent=1 // pred_fallthru
      _
    %v59 = vld [vmem:[%s0] sm:$0xff]
    %v60 = vld [vmem:[#allocation2] sm:$0xff]
    %v61 = vld [vmem:[%s2] sm:$0xff]
    %v62 = vld [vmem:[%s2 + $0x8] sm:$0xff]
    %v63 = vld [vmem:[#allocation5] sm:$0xff]
    %v64 = vld [vmem:[#allocation5 + $0x8] sm:$0xff]
    %vm65 = vcmask 130048
    %v67 = vsel %vm65, %v60, 0
    %69 = vmatprep.subr.mxu0 0.0
    %70 = vmatpush1.msra.mxu0 0.0
    %71 = vmatprep.subr.mxu0 0.0
    %72 = vmatpush1.msra.mxu0 0.0
    %73 = vmatprep.subr.mxu0 0.0
    %74 = vmatpush1.msra.mxu0 0.0
    %75 = vmatprep.subr.mxu0 0.0
    %76 = vmatpush1.msra.mxu0 0.0
    %77 = vmatprep.subr.mxu0 0.0
    %78 = vmatpush1.msra.mxu0 0.0
    %79 = vmatprep.subr.mxu0 0.0
    %80 = vmatpush1.msra.mxu0 0.0
    %81 = vmatprep.subr.mxu0 0.0
    %82 = vmatpush1.msra.mxu0 0.0
    %83 = vmatprep.subr.mxu0 0.0
    %84 = vmatpush1.msra.mxu0 0.0
    %85 = vmatprep.subr.mxu0 0.0
    %86 = vmatpush1.msra.mxu0 0.0
    %87 = vmatprep.subr.mxu0 0.0
    %88 = vmatpush1.msra.mxu0 0.0
    %89 = vmatprep.subr.mxu0 0.0
    %90 = vmatpush1.msra.mxu0 0.0
    %91 = vmatprep.subr.mxu0 0.0
    %92 = vmatpush1.msra.mxu0 0.0
    %93 = vmatprep.subr.mxu0 0.0
    %94 = vmatpush1.msra.mxu0 0.0
    %95 = vmatprep.subr.mxu0 0.0
    %96 = vmatpush1.msra.mxu0 0.0
    %97 = vmatprep.subr.mxu0 0.0
    %98 = vmatpush1.msra.mxu0 %v64
    %99 = vmatprep.subr.mxu0 0.0
    %100 = vmatpush1.msra.mxu0 %v63
    %101 = vmatprep.subr.mxu0 0.0
    %102 = vmatpush2.msra.mxu0 0.0
    %103 = vmatprep.subr.mxu0 0.0
    %104 = vmatpush2.msra.mxu0 0.0
    %105 = vmatprep.subr.mxu0 0.0
    %106 = vmatpush2.msra.mxu0 0.0
    %107 = vmatprep.subr.mxu0 0.0
    %108 = vmatpush2.msra.mxu0 0.0
    %109 = vmatprep.subr.mxu0 0.0
    %110 = vmatpush2.msra.mxu0 0.0
    %111 = vmatprep.subr.mxu0 0.0
    %112 = vmatpush2.msra.mxu0 0.0
    %113 = vmatprep.subr.mxu0 0.0
    %114 = vmatpush2.msra.mxu0 0.0
    %115 = vmatprep.subr.mxu0 0.0
    %116 = vmatpush2.msra.mxu0 0.0
    %117 = vmatprep.subr.mxu0 0.0
    %118 = vmatpush2.msra.mxu0 0.0
    %119 = vmatprep.subr.mxu0 0.0
    %120 = vmatpush2.msra.mxu0 0.0
    %121 = vmatprep.subr.mxu0 0.0
    %122 = vmatpush2.msra.mxu0 0.0
    %123 = vmatprep.subr.mxu0 0.0
    %124 = vmatpush2.msra.mxu0 0.0
    %125 = vmatprep.subr.mxu0 0.0
    %126 = vmatpush2.msra.mxu0 0.0
    %127 = vmatprep.subr.mxu0 0.0
    %128 = vmatpush2.msra.mxu0 0.0
    %129 = vmatprep.subr.mxu0 0.0
    %130 = vmatpush2.msra.mxu0 0.0
    %131 = vmatprep.subr.mxu0 0.0
    %132 = vmatpush2.msra.mxu0 0.0
    %133 = vmatprep.mubr.f32.mxu0 0.0
    %134 = vmatmul.mubr.f32.gmra.mxu0 %v67
    %v135 = vpop.f32.mrf.mxu0
    %v136 = vadd.f32 0.0, %v135
    %v137 = vpop.f32.mrf.mxu0
    %138 = vdwg.mxu0
    %v140 = vsel %vm65, %v59, 0
    %142 = vmatprep.subr.mxu0 0.0
    %143 = vmatpush1.msra.mxu0 0.0
    %144 = vmatprep.subr.mxu0 0.0
    %145 = vmatpush1.msra.mxu0 0.0
    %146 = vmatprep.subr.mxu0 0.0
    %147 = vmatpush1.msra.mxu0 0.0
    %148 = vmatprep.subr.mxu0 0.0
    %149 = vmatpush1.msra.mxu0 0.0
    %150 = vmatprep.subr.mxu0 0.0
    %151 = vmatpush1.msra.mxu0 0.0
    %152 = vmatprep.subr.mxu0 0.0
    %153 = vmatpush1.msra.mxu0 0.0
    %154 = vmatprep.subr.mxu0 0.0
    %155 = vmatpush1.msra.mxu0 0.0
    %156 = vmatprep.subr.mxu0 0.0
    %157 = vmatpush1.msra.mxu0 0.0
    %158 = vmatprep.subr.mxu0 0.0
    %159 = vmatpush1.msra.mxu0 0.0
    %160 = vmatprep.subr.mxu0 0.0
    %161 = vmatpush1.msra.mxu0 0.0
    %162 = vmatprep.subr.mxu0 0.0
    %163 = vmatpush1.msra.mxu0 0.0
    %164 = vmatprep.subr.mxu0 0.0
    %165 = vmatpush1.msra.mxu0 0.0
    %166 = vmatprep.subr.mxu0 0.0
    %167 = vmatpush1.msra.mxu0 0.0
    %168 = vmatprep.subr.mxu0 0.0
    %169 = vmatpush1.msra.mxu0 0.0
    %170 = vmatprep.subr.mxu0 0.0
    %171 = vmatpush1.msra.mxu0 %v62
    %172 = vmatprep.subr.mxu0 0.0
    %173 = vmatpush1.msra.mxu0 %v61
    %174 = vmatprep.subr.mxu0 0.0
    %175 = vmatpush2.msra.mxu0 0.0
    %176 = vmatprep.subr.mxu0 0.0
    %177 = vmatpush2.msra.mxu0 0.0
    %178 = vmatprep.subr.mxu0 0.0
    %179 = vmatpush2.msra.mxu0 0.0
    %180 = vmatprep.subr.mxu0 0.0
    %181 = vmatpush2.msra.mxu0 0.0
    %182 = vmatprep.subr.mxu0 0.0
    %183 = vmatpush2.msra.mxu0 0.0
    %184 = vmatprep.subr.mxu0 0.0
    %185 = vmatpush2.msra.mxu0 0.0
    %186 = vmatprep.subr.mxu0 0.0
    %187 = vmatpush2.msra.mxu0 0.0
    %188 = vmatprep.subr.mxu0 0.0
    %189 = vmatpush2.msra.mxu0 0.0
    %190 = vmatprep.subr.mxu0 0.0
    %191 = vmatpush2.msra.mxu0 0.0
    %192 = vmatprep.subr.mxu0 0.0
    %193 = vmatpush2.msra.mxu0 0.0
    %194 = vmatprep.subr.mxu0 0.0
    %195 = vmatpush2.msra.mxu0 0.0
    %196 = vmatprep.subr.mxu0 0.0
    %197 = vmatpush2.msra.mxu0 0.0
    %198 = vmatprep.subr.mxu0 0.0
    %199 = vmatpush2.msra.mxu0 0.0
    %200 = vmatprep.subr.mxu0 0.0
    %201 = vmatpush2.msra.mxu0 0.0
    %202 = vmatprep.subr.mxu0 0.0
    %203 = vmatpush2.msra.mxu0 0.0
    %204 = vmatprep.subr.mxu0 0.0
    %205 = vmatpush2.msra.mxu0 0.0
    %206 = vmatprep.mubr.f32.mxu0 0.0
    %207 = vmatmul.mubr.f32.gmra.mxu0 %v140
    %v208 = vpop.f32.mrf.mxu0
    %v209 = vadd.f32 %v136, %v208
    %v210 = vpop.f32.mrf.mxu0
    %211 = vdwg.mxu0
    %v212 = vld [vmem:[%s4] sm:$0x1]
    %v214 = vlaneseq
    %v215 = vshrl.u32 %v214, 7
    %v216 = vsub.s32 0, %v215
    %v217 = vrot.slane %v212, %v216
    %v219 = vadd.f32 %v209, %v217
    %v220 = vmul.f32 %v219, 0.01
    %v221 = vmax.f32 %v219, %v220
    %v222 = vld [vmem:[%s5] sm:$0xff]
    %v223 = vld [vmem:[%s5 + $0x8] sm:$0xff]
    %v224 = vld [vmem:[%s5 + $0x10] sm:$0xff]
    %v225 = vld [vmem:[%s5 + $0x18] sm:$0xff]
    %v226 = vld [vmem:[%s6] sm:$0x1]
    %v228 = vlaneseq
    %v229 = vshrl.u32 %v228, 7
    %v230 = vsub.s32 0, %v229
    %v231 = vrot.slane %v226, %v230
    %vm233 = vcmask 261120
    %v235 = vsel %vm233, %v221, 0
    %237 = vmatprep.subr.mxu0 0.0
    %238 = vmatpush1.msra.mxu0 0.0
    %239 = vmatprep.subr.mxu0 0.0
    %240 = vmatpush1.msra.mxu0 0.0
    %241 = vmatprep.subr.mxu0 0.0
    %242 = vmatpush1.msra.mxu0 0.0
    %243 = vmatprep.subr.mxu0 0.0
    %244 = vmatpush1.msra.mxu0 0.0
    %245 = vmatprep.subr.mxu0 0.0
    %246 = vmatpush1.msra.mxu0 0.0
    %247 = vmatprep.subr.mxu0 0.0
    %248 = vmatpush1.msra.mxu0 0.0
    %249 = vmatprep.subr.mxu0 0.0
    %250 = vmatpush1.msra.mxu0 0.0
    %251 = vmatprep.subr.mxu0 0.0
    %252 = vmatpush1.msra.mxu0 0.0
    %253 = vmatprep.subr.mxu0 0.0
    %254 = vmatpush1.msra.mxu0 0.0
    %255 = vmatprep.subr.mxu0 0.0
    %256 = vmatpush1.msra.mxu0 0.0
    %257 = vmatprep.subr.mxu0 0.0
    %258 = vmatpush1.msra.mxu0 0.0
    %259 = vmatprep.subr.mxu0 0.0
    %260 = vmatpush1.msra.mxu0 0.0
    %261 = vmatprep.subr.mxu0 0.0
    %262 = vmatpush1.msra.mxu0 %v225
    %263 = vmatprep.subr.mxu0 0.0
    %264 = vmatpush1.msra.mxu0 %v224
    %265 = vmatprep.subr.mxu0 0.0
    %266 = vmatpush1.msra.mxu0 %v223
    %267 = vmatprep.subr.mxu0 0.0
    %268 = vmatpush1.msra.mxu0 %v222
    %269 = vmatprep.subr.mxu0 0.0
    %270 = vmatpush2.msra.mxu0 0.0
    %271 = vmatprep.subr.mxu0 0.0
    %272 = vmatpush2.msra.mxu0 0.0
    %273 = vmatprep.subr.mxu0 0.0
    %274 = vmatpush2.msra.mxu0 0.0
    %275 = vmatprep.subr.mxu0 0.0
    %276 = vmatpush2.msra.mxu0 0.0
    %277 = vmatprep.subr.mxu0 0.0
    %278 = vmatpush2.msra.mxu0 0.0
    %279 = vmatprep.subr.mxu0 0.0
    %280 = vmatpush2.msra.mxu0 0.0
    %281 = vmatprep.subr.mxu0 0.0
    %282 = vmatpush2.msra.mxu0 0.0
    %283 = vmatprep.subr.mxu0 0.0
    %284 = vmatpush2.msra.mxu0 0.0
    %285 = vmatprep.subr.mxu0 0.0
    %286 = vmatpush2.msra.mxu0 0.0
    %287 = vmatprep.subr.mxu0 0.0
    %288 = vmatpush2.msra.mxu0 0.0
    %289 = vmatprep.subr.mxu0 0.0
    %290 = vmatpush2.msra.mxu0 0.0
    %291 = vmatprep.subr.mxu0 0.0
    %292 = vmatpush2.msra.mxu0 0.0
    %293 = vmatprep.subr.mxu0 0.0
    %294 = vmatpush2.msra.mxu0 0.0
    %295 = vmatprep.subr.mxu0 0.0
    %296 = vmatpush2.msra.mxu0 0.0
    %297 = vmatprep.subr.mxu0 0.0
    %298 = vmatpush2.msra.mxu0 0.0
    %299 = vmatprep.subr.mxu0 0.0
    %300 = vmatpush2.msra.mxu0 0.0
    %301 = vmatprep.mubr.f32.mxu0 0.0
    %302 = vmatmul.mubr.f32.gmra.mxu0 %v235
    %v303 = vpop.f32.mrf.mxu0
    %v304 = vadd.f32 %v231, %v303
    %v305 = vpop.f32.mrf.mxu0
    %306 = vdwg.mxu0
    %v307 = vmul.f32 %v304, 0.01
    %v308 = vmax.f32 %v304, %v307
    %v309 = vld [vmem:[%s7] sm:$0xff]
    %v310 = vld [vmem:[%s7 + $0x8] sm:$0xff]
    %v311 = vld [vmem:[%s7 + $0x10] sm:$0xff]
    %v312 = vld [vmem:[%s7 + $0x18] sm:$0xff]
    %v313 = vld [vmem:[%s8] sm:$0x1]
    %v315 = vlaneseq
    %v316 = vshrl.u32 %v315, 7
    %v317 = vsub.s32 0, %v316
    %v318 = vrot.slane %v313, %v317
    %v321 = vsel %vm233, %v308, 0
    %323 = vmatprep.subr.mxu0 0.0
    %324 = vmatpush1.msra.mxu0 0.0
    %325 = vmatprep.subr.mxu0 0.0
    %326 = vmatpush1.msra.mxu0 0.0
    %327 = vmatprep.subr.mxu0 0.0
    %328 = vmatpush1.msra.mxu0 0.0
    %329 = vmatprep.subr.mxu0 0.0
    %330 = vmatpush1.msra.mxu0 0.0
    %331 = vmatprep.subr.mxu0 0.0
    %332 = vmatpush1.msra.mxu0 0.0
    %333 = vmatprep.subr.mxu0 0.0
    %334 = vmatpush1.msra.mxu0 0.0
    %335 = vmatprep.subr.mxu0 0.0
    %336 = vmatpush1.msra.mxu0 0.0
    %337 = vmatprep.subr.mxu0 0.0
    %338 = vmatpush1.msra.mxu0 0.0
    %339 = vmatprep.subr.mxu0 0.0
    %340 = vmatpush1.msra.mxu0 0.0
    %341 = vmatprep.subr.mxu0 0.0
    %342 = vmatpush1.msra.mxu0 0.0
    %343 = vmatprep.subr.mxu0 0.0
    %344 = vmatpush1.msra.mxu0 0.0
    %345 = vmatprep.subr.mxu0 0.0
    %346 = vmatpush1.msra.mxu0 0.0
    %347 = vmatprep.subr.mxu0 0.0
    %348 = vmatpush1.msra.mxu0 %v312
    %349 = vmatprep.subr.mxu0 0.0
    %350 = vmatpush1.msra.mxu0 %v311
    %351 = vmatprep.subr.mxu0 0.0
    %352 = vmatpush1.msra.mxu0 %v310
    %353 = vmatprep.subr.mxu0 0.0
    %354 = vmatpush1.msra.mxu0 %v309
    %355 = vmatprep.subr.mxu0 0.0
    %356 = vmatpush2.msra.mxu0 0.0
    %357 = vmatprep.subr.mxu0 0.0
    %358 = vmatpush2.msra.mxu0 0.0
    %359 = vmatprep.subr.mxu0 0.0
    %360 = vmatpush2.msra.mxu0 0.0
    %361 = vmatprep.subr.mxu0 0.0
    %362 = vmatpush2.msra.mxu0 0.0
    %363 = vmatprep.subr.mxu0 0.0
    %364 = vmatpush2.msra.mxu0 0.0
    %365 = vmatprep.subr.mxu0 0.0
    %366 = vmatpush2.msra.mxu0 0.0
    %367 = vmatprep.subr.mxu0 0.0
    %368 = vmatpush2.msra.mxu0 0.0
    %369 = vmatprep.subr.mxu0 0.0
    %370 = vmatpush2.msra.mxu0 0.0
    %371 = vmatprep.subr.mxu0 0.0
    %372 = vmatpush2.msra.mxu0 0.0
    %373 = vmatprep.subr.mxu0 0.0
    %374 = vmatpush2.msra.mxu0 0.0
    %375 = vmatprep.subr.mxu0 0.0
    %376 = vmatpush2.msra.mxu0 0.0
    %377 = vmatprep.subr.mxu0 0.0
    %378 = vmatpush2.msra.mxu0 0.0
    %379 = vmatprep.subr.mxu0 0.0
    %380 = vmatpush2.msra.mxu0 0.0
    %381 = vmatprep.subr.mxu0 0.0
    %382 = vmatpush2.msra.mxu0 0.0
    %383 = vmatprep.subr.mxu0 0.0
    %384 = vmatpush2.msra.mxu0 0.0
    %385 = vmatprep.subr.mxu0 0.0
    %386 = vmatpush2.msra.mxu0 0.0
    %387 = vmatprep.mubr.f32.mxu0 0.0
    %388 = vmatmul.mubr.f32.gmra.mxu0 %v321
    %v389 = vpop.f32.mrf.mxu0
    %v390 = vadd.f32 %v318, %v389
    %v391 = vpop.f32.mrf.mxu0
    %392 = vdwg.mxu0
    %393 = vst.msk [vmem:[#allocation7] sm:$0xff] %vm65, %v390
    // Predicated region
    $region46: #{tpu_custom_call.1} parent=1 // pred_check
      _
    $region47: #{tpu_custom_call.1} parent=1 // pred_check_branch
      %395 = sbr.rel (0) target = $region49
    $region48: #{tpu_custom_call.1} parent=1 // pred_region
      %s397 = ssub.s32 128, 128
      %398 = vsyncadd [#allocation4], %s397
      %s400 = sshll.u32 [#allocation7], 4
      %s401 = int_to_ptr.vmem [resolvable:$true] %s400
      %403 = dma.vmem_to_hbm [thread:$0]  %s401, 128, %s9, [#allocation4]
    $region49: #{tpu_custom_call.1} parent=1 // pred_fallthru
      _
    // Predicated region
    $region50: #{tpu_custom_call.1} parent=1 // pred_check
      _
    $region51: #{tpu_custom_call.1} parent=1 // pred_check_branch
      %405 = sbr.rel (0) target = $region53
    $region52: #{tpu_custom_call.1} parent=1 // pred_region
      %406 = dma.done [#allocation4], 128
    $region53: #{tpu_custom_call.1} parent=1 // pred_fallthru
      _
    %407 = vsyncpa [#allocation3], 1
    %408 = vsyncpa [#allocation6], 1
    %409 = vsyncpa [#allocation4], 1

</llo_original>
